<compile_context>
chip_gen: v7x
topology: tpu7x:2x2x1
jax: 0.10.0
libtpu: 0.0.40
codegen_flags: <defaults>
</compile_context>

<pallas_src>
import functools
import math

import jax
import jax.numpy as jnp
from jax.experimental import pallas as pl
from jax.experimental.pallas import tpu as pltpu

_MIB = 1024 * 1024


def _conv1x1_kernel(x_ref, w_ref, o_ref, *, relu: bool, nb: int):
    # x_ref : (nb, C_in, TL)   input tile
    # w_ref : (t_co, C_in)     weight tile (resident when C_out is untiled)
    # o_ref : (nb, t_co, TL)   output tile
    w = w_ref[...]
    for i in range(nb):  # nb is a small static int -> unrolled 2-D MXU dots
        y = jnp.dot(w, x_ref[i], preferred_element_type=jnp.float32)
        if relu:
            y = jnp.maximum(y, 0.0)
        o_ref[i] = y.astype(o_ref.dtype)


def _vmem_limit_bytes():
    """Per-generation scoped-VMEM limit (leaving compiler headroom)."""
    try:
        cap = int(pltpu.get_tpu_info().vmem_capacity_bytes)
    except Exception:
        cap = 128 * _MIB
    # v7x (64 MiB physical) -> 48 MiB scoped; v5e/v6e (128 MiB) -> 96 MiB.
    return max(32 * _MIB, min(cap - 16 * _MIB, 96 * _MIB))


def _weight_block_spec(block_shape, index_map, *, single_buffer):
    if single_buffer:
        # Constant block index -> double-buffering only wastes VMEM.
        try:
            return pl.BlockSpec(block_shape, index_map, pipeline_mode=pl.Buffered(1))
        except TypeError:
            pass  # jax build without pipeline_mode: fall back to default buffering.
    return pl.BlockSpec(block_shape, index_map)


def initialized_conv1d(
    x,
    weight,
    *,
    relu=False,
    cout_tile=512,
    max_lane_tile=4096,
    weight_resident_bytes=None,
):
    """x: (N, C_in, L); weight: (C_out, C_in) -> (N, C_out, L).

    Equivalent to `F.relu(conv1d(x, w, kernel_size=1))` (or plain conv1d when
    relu=False).  f32 accumulation on the MXU regardless of input dtype.
    """
    n, c_in, length = x.shape
    c_out, c_in_w = weight.shape
    assert c_in_w == c_in, "weight / input channel mismatch"

    x_item = jnp.dtype(x.dtype).itemsize
    w_item = jnp.dtype(weight.dtype).itemsize

    vmem_limit = _vmem_limit_bytes()
    tile_budget = int(vmem_limit * 0.85)  # headroom for Mosaic internal scratch

    # ---- C_out (sublane) tiling: keep the whole weight resident unless big.
    w_bytes = c_out * c_in * w_item
    if weight_resident_bytes is None:
        weight_resident_bytes = tile_budget // 4
    if w_bytes <= weight_resident_bytes:
        t_co, n_co = c_out, 1  # full-extent block, stays resident across the grid
    else:
        pack = max(8, 32 // x_item)  # sublane pack of the output dtype
        t_co = min(c_out, max(pack, (cout_tile // pack) * pack))
        n_co = pl.cdiv(c_out, t_co)
    single_w = (n_co == 1) and (w_bytes >= 1 * _MIB)
    w_vmem = t_co * c_in * w_item * (1 if single_w else 2)
    # TODO(synk): if C_in grows past a few thousand, also tile the contraction
    # axis with a VMEM f32 accumulator + pl.when init/finalize (axis last,
    # marked "arbitrary").  Not needed for typical channel counts.

    # ---- length (lane) tiling: VMEM-budget-driven, lane-dense (128-multiples).
    stream_budget = max(tile_budget - w_vmem, 2 * _MIB)
    bytes_per_lane = (c_in + t_co) * x_item * 2  # x + out tiles, double-buffered
    lanes = min(stream_budget // bytes_per_lane, max_lane_tile)
    lanes = max(128, (lanes // 128) * 128)

    if length <= lanes:
        tl, n_l = length, 1  # full-extent block: any length is legal
        # Short L: pack several batch rows per grid step to amortize the
        # per-step overhead and issue larger HBM transfers.
        padded_l = ((length + 127) // 128) * 128  # VMEM pads the lane dim to 128
        nb = min(n, max(1, lanes // padded_l), 64)
        while n % nb:  # keep batch blocks full (no ragged leading blocks)
            nb -= 1
    else:
        tl = lanes
        n_l = pl.cdiv(length, tl)
        nb = 1
    n_b = pl.cdiv(n, nb)

    kernel = functools.partial(_conv1x1_kernel, relu=relu, nb=nb)

    # Grid: (batch blocks, length tiles, C_out tiles).  C_out innermost so the
    # x block index is invariant across it -> x is DMA'd from HBM exactly once
    # even when the weight is tiled.
    grid = (n_b, n_l, n_co)
    x_spec = pl.BlockSpec((nb, c_in, tl), lambda b, l, co: (b, 0, l))
    w_spec = _weight_block_spec(
        (t_co, c_in), lambda b, l, co: (co, 0), single_buffer=single_w
    )
    o_spec = pl.BlockSpec((nb, t_co, tl), lambda b, l, co: (b, co, l))

    cost = pl.CostEstimate(
        flops=2 * n * c_out * c_in * length,
        transcendentals=0,
        bytes_accessed=(
            n * c_in * length * x_item                 # x read once (resident over co)
            + n * c_out * length * x_item              # out written once
            + (w_bytes if n_co == 1 else n_b * n_l * c_out * c_in * w_item)
        ),
    )

    return pl.pallas_call(
        kernel,
        out_shape=jax.ShapeDtypeStruct((n, c_out, length), x.dtype),
        grid_spec=pltpu.PrefetchScalarGridSpec(
            num_scalar_prefetch=0,
            grid=grid,
            in_specs=[x_spec, w_spec],
            out_specs=o_spec,
        ),
        compiler_params=pltpu.CompilerParams(
            # batch/length axes partition x -> let megacore (v7x) shard those;
            # sharding the C_out axis would duplicate x reads across cores.
            dimension_semantics=("parallel", "parallel", "arbitrary"),
            vmem_limit_bytes=vmem_limit,
        ),
        cost_estimate=cost,
    )(x, weight)


def make_weight(key, in_channels, out_channels, kernel_size=1, relu=False):
    """Deterministic init matching the PyTorch module's __init__ semantics."""
    # TODO(synk): general kernel_size/stride/padding/groups of nn.Conv1d are
    # not implemented; the module's default (pointwise) configuration is.
    assert kernel_size == 1, "only the kernel_size=1 (pointwise) path is implemented"
    fan_in = in_channels * kernel_size
    fan_out = out_channels * kernel_size
    if relu:
        # kaiming_normal_(nonlinearity='relu'): std = sqrt(2 / fan_in)
        std = math.sqrt(2.0 / fan_in)
    else:
        # xavier_normal_(gain=1): std = sqrt(2 / (fan_in + fan_out))
        std = math.sqrt(2.0 / (fan_in + fan_out))
    w = std * jax.random.normal(
        key, (out_channels, in_channels, kernel_size), dtype=jnp.float32
    )
    return w[:, :, 0]  # kernel_size == 1 -> squeeze the tap dimension


if __name__ == "__main__":
    key = jax.random.PRNGKey(0)
    kx, kw1, kw2 = jax.random.split(key, 3)

    # Small deterministic shapes consistent with the module's forward.
    batch, in_channels, out_channels, length = 2, 8, 16, 256
    x = jax.random.normal(kx, (batch, in_channels, length), dtype=jnp.float32)

    w_relu = make_weight(kw1, in_channels, out_channels, relu=True)
    w_lin = make_weight(kw2, in_channels, out_channels, relu=False)

    # Exercise the three structural paths:
    #  1) resident weight + batched rows per block (short L path)
    #  2) tiled length axis (multi L-tile grid, nb=1)
    #  3) tiled C_out with C_out as the innermost (x-resident) grid axis
    cases = [
        (True, w_relu, {}),
        (False, w_lin, dict(max_lane_tile=128)),
        (False, w_lin, dict(weight_resident_bytes=0, cout_tile=8)),
    ]

    ok = True
    for relu, w, kwargs in cases:
        out = jax.block_until_ready(initialized_conv1d(x, w, relu=relu, **kwargs))
        ref = jnp.einsum("oi,nil->nol", w, x)
        if relu:
            ref = jnp.maximum(ref, 0.0)
        ok &= out.shape == (batch, out_channels, length)
        ok &= bool(jnp.allclose(out, ref, atol=1e-5, rtol=1e-5))

    assert ok
    print("KERNEL_OK")
</pallas_src>

<mosaic_0001>
module attributes {stable_mosaic.version = 11 : i64} {
  func.func @_conv1x1_kernel(%arg0: i32, %arg1: i32, %arg2: i32, %arg3: memref<2x8x256xf32, #tpu.memory_space<vmem>>, %arg4: memref<16x8xf32, #tpu.memory_space<vmem>>, %arg5: memref<2x16x256xf32, #tpu.memory_space<vmem>>) attributes {dimension_semantics = [#tpu.dimension_semantics<parallel>, #tpu.dimension_semantics<parallel>, #tpu.dimension_semantics<arbitrary>], iteration_bounds = array<i64: 1, 1, 1>, scalar_prefetch = 0 : i64, scratch_operands = 0 : i64, tpu.core_type = #tpu.core_type<tc>, window_params = [{transform_indices = @transform_0, window_bounds = array<i64: 2, 8, 256>}, {transform_indices = @transform_1, window_bounds = array<i64: 16, 8>}, {transform_indices = @transform_2, window_bounds = array<i64: 2, 16, 256>}]} {
    %c0 = arith.constant 0 : index
    %c0_0 = arith.constant 0 : index
    %0 = vector.load %arg4[%c0, %c0_0] : memref<16x8xf32, #tpu.memory_space<vmem>>, vector<16x8xf32>
    %c0_1 = arith.constant 0 : index
    %c0_2 = arith.constant 0 : index
    %c0_3 = arith.constant 0 : index
    %1 = vector.load %arg3[%c0_1, %c0_2, %c0_3] : memref<2x8x256xf32, #tpu.memory_space<vmem>>, vector<1x8x256xf32>
    %2 = vector.shape_cast %1 : vector<1x8x256xf32> to vector<8x256xf32>
    %cst = arith.constant dense<0.000000e+00> : vector<16x256xf32>
    %3 = tpu.matmul %0, %2, %cst {dimension_numbers = #tpu.dot_dimension_numbers<[1], [0], [0], [1], [0, 0, 1, 1], [], []>} : vector<16x8xf32>, vector<8x256xf32>, vector<16x256xf32> -> vector<16x256xf32>
    %cst_4 = arith.constant 0.000000e+00 : f32
    %4 = vector.broadcast %cst_4 : f32 to vector<16x256xf32>
    %5 = arith.maximumf %3, %4 : vector<16x256xf32>
    %c0_5 = arith.constant 0 : index
    %c0_6 = arith.constant 0 : index
    %c0_7 = arith.constant 0 : index
    %6 = vector.load %arg5[%c0_5, %c0_6, %c0_7] : memref<2x16x256xf32, #tpu.memory_space<vmem>>, vector<1x16x256xf32>
    %7 = vector.shape_cast %6 : vector<1x16x256xf32> to vector<16x256xf32>
    %8 = vector.shape_cast %5 : vector<16x256xf32> to vector<1x16x256xf32>
    tpu.vector_store %arg5[%c0_5, %c0_6, %c0_7], %8 {strides = array<i32>} : memref<2x16x256xf32, #tpu.memory_space<vmem>>, vector<1x16x256xf32>,
    %c1 = arith.constant 1 : index
    %c0_8 = arith.constant 0 : index
    %c0_9 = arith.constant 0 : index
    %9 = vector.load %arg3[%c1, %c0_8, %c0_9] : memref<2x8x256xf32, #tpu.memory_space<vmem>>, vector<1x8x256xf32>
    %10 = vector.shape_cast %9 : vector<1x8x256xf32> to vector<8x256xf32>
    %cst_10 = arith.constant dense<0.000000e+00> : vector<16x256xf32>
    %11 = tpu.matmul %0, %10, %cst_10 {dimension_numbers = #tpu.dot_dimension_numbers<[1], [0], [0], [1], [0, 0, 1, 1], [], []>} : vector<16x8xf32>, vector<8x256xf32>, vector<16x256xf32> -> vector<16x256xf32>
    %cst_11 = arith.constant 0.000000e+00 : f32
    %12 = vector.broadcast %cst_11 : f32 to vector<16x256xf32>
    %13 = arith.maximumf %11, %12 : vector<16x256xf32>
    %c1_12 = arith.constant 1 : index
    %c0_13 = arith.constant 0 : index
    %c0_14 = arith.constant 0 : index
    %14 = vector.load %arg5[%c1_12, %c0_13, %c0_14] : memref<2x16x256xf32, #tpu.memory_space<vmem>>, vector<1x16x256xf32>
    %15 = vector.shape_cast %14 : vector<1x16x256xf32> to vector<16x256xf32>
    %16 = vector.shape_cast %13 : vector<16x256xf32> to vector<1x16x256xf32>
    tpu.vector_store %arg5[%c1_12, %c0_13, %c0_14], %16 {strides = array<i32>} : memref<2x16x256xf32, #tpu.memory_space<vmem>>, vector<1x16x256xf32>,
    return
  }
  func.func @transform_0(%arg0: i32, %arg1: i32, %arg2: i32) -> (i32, i32, i32) {
    %c0_i32 = arith.constant 0 : i32
    %c0_i32_0 = arith.constant 0 : i32
    return %arg0, %c0_i32, %arg1 : i32, i32, i32
  }
  func.func @transform_1(%arg0: i32, %arg1: i32, %arg2: i32) -> (i32, i32) {
    %c0_i32 = arith.constant 0 : i32
    %c0_i32_0 = arith.constant 0 : i32
    return %arg2, %c0_i32 : i32, i32
  }
  func.func @transform_2(%arg0: i32, %arg1: i32, %arg2: i32) -> (i32, i32, i32) {
    %c0_i32 = arith.constant 0 : i32
    return %arg0, %arg2, %arg1 : i32, i32, i32
  }
}

</mosaic_0001>

<llo_original>
// kernel: tpu_custom_call.1
$region0: #{tpu_custom_call.1}
  #allocation0 [shape = 'u32[]', space=smem, size = 0x4, offset = 0x4, fixed_abs, tag = 'smem constant byte address 0x4 - core index']
  #allocation1 [shape = 'u32[144,128]{1,0:T(1,128)}', space=vmem, size = 0x12000, scoped, tag = 'internal scratch']
  %s0 = inlined_call_operand.hbm [shape: f32[2,8,256], index: 0, kind: input, shape index: {}]
  %s1 = inlined_call_operand.hbm [shape: f32[16,8], index: 1, kind: input, shape index: {}]
  %s2 = inlined_call_operand.hbm [shape: f32[2,16,256], index: 2, kind: output, shape index: {}]
  %s3 = sld [smem:[#allocation0]]
  $region26: #{tpu_custom_call.1} parent=0
    _
  %s5 = ssub.s32 1, %s3
  %s6 = scalar_select 0, %s5, %s3
  $region1: #{tpu_custom_call.1} parent=0
    #allocation2 [shape = 'u8[16384]{0}', space=vmem, size = 0x4000, scoped, tag = 'input window, operand 0, single buffered']
    #allocation3 [shape = 's32[1]{0}', space=sflag, size = 0x4, scoped, tag = 'scoped memory for tpu_custom_call.1']
    #allocation4 [shape = 's32[1]{0}', space=sflag, size = 0x4, scoped, tag = 'scoped memory for tpu_custom_call.1']
    #allocation5 [shape = 'u8[8192]{0}', space=vmem, size = 0x2000, scoped, tag = 'input window, operand 1, single buffered']
    #allocation6 [shape = 's32[1]{0}', space=sflag, size = 0x4, scoped, tag = 'scoped memory for tpu_custom_call.1']
    #allocation7 [shape = 'u8[32768]{0}', space=vmem, size = 0x8000, scoped, tag = 'output window, operand 0, single buffered']
    %7 = vsyncpa [#allocation3], 0
    %8 = vsyncpa [#allocation6], 0
    %9 = vsyncpa [#allocation4], 0
    // Predicated region
    $region2: #{tpu_custom_call.1} parent=1 // pred_check
      _
    $region3: #{tpu_custom_call.1} parent=1 // pred_check_branch
      %11 = sbr.rel (0) target = $region5
    $region4: #{tpu_custom_call.1} parent=1 // pred_region
      %s13 = ssub.s32 512, 512
      %14 = vsyncadd [#allocation3], %s13
      %s15 = sshll.u32 [#allocation2], 4
      %s16 = int_to_ptr.vmem [resolvable:$true] %s15
      %21 = dma.hbm_to_vmem [thread:$0]  %s0, 512, %s16, [#allocation3], 256, 256, 16
    $region5: #{tpu_custom_call.1} parent=1 // pred_fallthru
      _
    // Predicated region
    $region6: #{tpu_custom_call.1} parent=1 // pred_check
      _
    $region7: #{tpu_custom_call.1} parent=1 // pred_check_branch
      %23 = sbr.rel (0) target = $region9
    $region8: #{tpu_custom_call.1} parent=1 // pred_region
      %s25 = ssub.s32 256, 256
      %26 = vsyncadd [#allocation6], %s25
      %s27 = sshll.u32 [#allocation5], 4
      %s28 = int_to_ptr.vmem [resolvable:$true] %s27
      %33 = dma.hbm_to_vmem [thread:$0]  %s1, 256, %s28, [#allocation6], 128, 128, 8
    $region9: #{tpu_custom_call.1} parent=1 // pred_fallthru
      _
    // Predicated region
    $region10: #{tpu_custom_call.1} parent=1 // pred_check
      _
    $region11: #{tpu_custom_call.1} parent=1 // pred_check_branch
      %35 = sbr.rel (0) target = $region13
    $region12: #{tpu_custom_call.1} parent=1 // pred_region
      %36 = dma.done [#allocation3], 512
    $region13: #{tpu_custom_call.1} parent=1 // pred_fallthru
      _
    // Predicated region
    $region14: #{tpu_custom_call.1} parent=1 // pred_check
      _
    $region15: #{tpu_custom_call.1} parent=1 // pred_check_branch
      %38 = sbr.rel (0) target = $region17
    $region16: #{tpu_custom_call.1} parent=1 // pred_region
      %39 = dma.done [#allocation6], 256
    $region17: #{tpu_custom_call.1} parent=1 // pred_fallthru
      _
    %v40 = vld [vmem:[#allocation5] sm:$0xff]
    %v41 = vld [vmem:[#allocation5 + $0x8] sm:$0xff]
    %v42 = vld [vmem:[#allocation2] sm:$0xff]
    %v43 = vld [vmem:[#allocation2 + $0x8] sm:$0xff]
    %vm44 = vcmask 64512
    %v46 = vsel %vm44, %v40, 0
    %v49 = vsel %vm44, %v41, 0
    %51 = vmatprep.subr.mxu0 %v43
    %52 = vmatpush1.msra.mxu0 %v42
    %53 = vmatprep.subr.mxu0 0.0
    %54 = vmatpush1.msra.mxu0 0.0
    %55 = vmatprep.subr.mxu0 0.0
    %56 = vmatpush1.msra.mxu0 0.0
    %57 = vmatprep.subr.mxu0 0.0
    %58 = vmatpush1.msra.mxu0 0.0
    %59 = vmatprep.subr.mxu0 0.0
    %60 = vmatpush1.msra.mxu0 0.0
    %61 = vmatprep.subr.mxu0 0.0
    %62 = vmatpush1.msra.mxu0 0.0
    %63 = vmatprep.subr.mxu0 0.0
    %64 = vmatpush1.msra.mxu0 0.0
    %65 = vmatprep.subr.mxu0 0.0
    %66 = vmatpush1.msra.mxu0 0.0
    %67 = vmatprep.subr.mxu0 0.0
    %68 = vmatpush1.msra.mxu0 0.0
    %69 = vmatprep.subr.mxu0 0.0
    %70 = vmatpush1.msra.mxu0 0.0
    %71 = vmatprep.subr.mxu0 0.0
    %72 = vmatpush1.msra.mxu0 0.0
    %73 = vmatprep.subr.mxu0 0.0
    %74 = vmatpush1.msra.mxu0 0.0
    %75 = vmatprep.subr.mxu0 0.0
    %76 = vmatpush1.msra.mxu0 0.0
    %77 = vmatprep.subr.mxu0 0.0
    %78 = vmatpush1.msra.mxu0 0.0
    %79 = vmatprep.subr.mxu0 0.0
    %80 = vmatpush1.msra.mxu0 0.0
    %81 = vmatprep.subr.mxu0 0.0
    %82 = vmatpush1.msra.mxu0 0.0
    %83 = vmatprep.subr.mxu0 0.0
    %84 = vmatpush1.msra.mxu0 0.0
    %85 = vmatprep.subr.mxu0 0.0
    %86 = vmatpush1.msra.mxu0 0.0
    %87 = vmatprep.subr.mxu0 0.0
    %88 = vmatpush1.msra.mxu0 0.0
    %89 = vmatprep.subr.mxu0 0.0
    %90 = vmatpush1.msra.mxu0 0.0
    %91 = vmatprep.subr.mxu0 0.0
    %92 = vmatpush1.msra.mxu0 0.0
    %93 = vmatprep.subr.mxu0 0.0
    %94 = vmatpush1.msra.mxu0 0.0
    %95 = vmatprep.subr.mxu0 0.0
    %96 = vmatpush1.msra.mxu0 0.0
    %97 = vmatprep.subr.mxu0 0.0
    %98 = vmatpush1.msra.mxu0 0.0
    %99 = vmatprep.subr.mxu0 0.0
    %100 = vmatpush1.msra.mxu0 0.0
    %101 = vmatprep.subr.mxu0 0.0
    %102 = vmatpush1.msra.mxu0 0.0
    %103 = vmatprep.subr.mxu0 0.0
    %104 = vmatpush1.msra.mxu0 0.0
    %105 = vmatprep.subr.mxu0 0.0
    %106 = vmatpush1.msra.mxu0 0.0
    %107 = vmatprep.subr.mxu0 0.0
    %108 = vmatpush1.msra.mxu0 0.0
    %109 = vmatprep.subr.mxu0 0.0
    %110 = vmatpush1.msra.mxu0 0.0
    %111 = vmatprep.subr.mxu0 0.0
    %112 = vmatpush1.msra.mxu0 0.0
    %113 = vmatprep.subr.mxu0 0.0
    %114 = vmatpush1.msra.mxu0 0.0
    %115 = vmatprep.mubr.f32.mxu0 0.0
    %116 = vmatmul.mubr.f32.gmra.mrb[0].mxu0 %v46
    %v117 = vpop.f32.mrb[0].mxu0
    %v118 = vadd.f32 0.0, %v117
    %v119 = vpop.f32.mrb[0].mxu0
    %v120 = vadd.f32 0.0, %v119
    %121 = vmatprep.mubr.f32.mxu0 0.0
    %122 = vmatmul.mubr.f32.gmra.mrb[0].mxu0 %v49
    %v123 = vpop.f32.mrb[0].mxu0
    %v124 = vadd.f32 0.0, %v123
    %v125 = vpop.f32.mrb[0].mxu0
    %v126 = vadd.f32 0.0, %v125
    %127 = vdwg.mxu0
    %v128 = vmax.f32 %v118, 0.0
    %v129 = vmax.f32 %v120, 0.0
    %v130 = vmax.f32 %v124, 0.0
    %v131 = vmax.f32 %v126, 0.0
    %132 = vst [vmem:[#allocation7] sm:$0xff] %v128
    %133 = vst [vmem:[#allocation7 + $0x8] sm:$0xff] %v129
    %134 = vst [vmem:[#allocation7 + $0x10] sm:$0xff] %v130
    %135 = vst [vmem:[#allocation7 + $0x18] sm:$0xff] %v131
    %s136 = scalar_lea.vmem [#allocation2], 16
    %v137 = vld [vmem:[%s136] sm:$0xff]
    %v138 = vld [vmem:[%s136 + $0x8] sm:$0xff]
    %139 = vmatprep.subr.mxu0 %v138
    %140 = vmatpush1.msra.mxu0 %v137
    %141 = vmatprep.subr.mxu0 0.0
    %142 = vmatpush1.msra.mxu0 0.0
    %143 = vmatprep.subr.mxu0 0.0
    %144 = vmatpush1.msra.mxu0 0.0
    %145 = vmatprep.subr.mxu0 0.0
    %146 = vmatpush1.msra.mxu0 0.0
    %147 = vmatprep.subr.mxu0 0.0
    %148 = vmatpush1.msra.mxu0 0.0
    %149 = vmatprep.subr.mxu0 0.0
    %150 = vmatpush1.msra.mxu0 0.0
    %151 = vmatprep.subr.mxu0 0.0
    %152 = vmatpush1.msra.mxu0 0.0
    %153 = vmatprep.subr.mxu0 0.0
    %154 = vmatpush1.msra.mxu0 0.0
    %155 = vmatprep.subr.mxu0 0.0
    %156 = vmatpush1.msra.mxu0 0.0
    %157 = vmatprep.subr.mxu0 0.0
    %158 = vmatpush1.msra.mxu0 0.0
    %159 = vmatprep.subr.mxu0 0.0
    %160 = vmatpush1.msra.mxu0 0.0
    %161 = vmatprep.subr.mxu0 0.0
    %162 = vmatpush1.msra.mxu0 0.0
    %163 = vmatprep.subr.mxu0 0.0
    %164 = vmatpush1.msra.mxu0 0.0
    %165 = vmatprep.subr.mxu0 0.0
    %166 = vmatpush1.msra.mxu0 0.0
    %167 = vmatprep.subr.mxu0 0.0
    %168 = vmatpush1.msra.mxu0 0.0
    %169 = vmatprep.subr.mxu0 0.0
    %170 = vmatpush1.msra.mxu0 0.0
    %171 = vmatprep.subr.mxu0 0.0
    %172 = vmatpush1.msra.mxu0 0.0
    %173 = vmatprep.subr.mxu0 0.0
    %174 = vmatpush1.msra.mxu0 0.0
    %175 = vmatprep.subr.mxu0 0.0
    %176 = vmatpush1.msra.mxu0 0.0
    %177 = vmatprep.subr.mxu0 0.0
    %178 = vmatpush1.msra.mxu0 0.0
    %179 = vmatprep.subr.mxu0 0.0
    %180 = vmatpush1.msra.mxu0 0.0
    %181 = vmatprep.subr.mxu0 0.0
    %182 = vmatpush1.msra.mxu0 0.0
    %183 = vmatprep.subr.mxu0 0.0
    %184 = vmatpush1.msra.mxu0 0.0
    %185 = vmatprep.subr.mxu0 0.0
    %186 = vmatpush1.msra.mxu0 0.0
    %187 = vmatprep.subr.mxu0 0.0
    %188 = vmatpush1.msra.mxu0 0.0
    %189 = vmatprep.subr.mxu0 0.0
    %190 = vmatpush1.msra.mxu0 0.0
    %191 = vmatprep.subr.mxu0 0.0
    %192 = vmatpush1.msra.mxu0 0.0
    %193 = vmatprep.subr.mxu0 0.0
    %194 = vmatpush1.msra.mxu0 0.0
    %195 = vmatprep.subr.mxu0 0.0
    %196 = vmatpush1.msra.mxu0 0.0
    %197 = vmatprep.subr.mxu0 0.0
    %198 = vmatpush1.msra.mxu0 0.0
    %199 = vmatprep.subr.mxu0 0.0
    %200 = vmatpush1.msra.mxu0 0.0
    %201 = vmatprep.subr.mxu0 0.0
    %202 = vmatpush1.msra.mxu0 0.0
    %203 = vmatprep.mubr.f32.mxu0 0.0
    %204 = vmatmul.mubr.f32.gmra.mrb[0].mxu0 %v46
    %v205 = vpop.f32.mrb[0].mxu0
    %v206 = vadd.f32 0.0, %v205
    %v207 = vpop.f32.mrb[0].mxu0
    %v208 = vadd.f32 0.0, %v207
    %209 = vmatprep.mubr.f32.mxu0 0.0
    %210 = vmatmul.mubr.f32.gmra.mrb[0].mxu0 %v49
    %v211 = vpop.f32.mrb[0].mxu0
    %v212 = vadd.f32 0.0, %v211
    %v213 = vpop.f32.mrb[0].mxu0
    %v214 = vadd.f32 0.0, %v213
    %215 = vdwg.mxu0
    %v216 = vmax.f32 %v206, 0.0
    %v217 = vmax.f32 %v208, 0.0
    %v218 = vmax.f32 %v212, 0.0
    %v219 = vmax.f32 %v214, 0.0
    %s220 = scalar_lea.vmem [#allocation7], 32
    %221 = vst [vmem:[%s220] sm:$0xff] %v216
    %222 = vst [vmem:[%s220 + $0x8] sm:$0xff] %v217
    %223 = vst [vmem:[%s220 + $0x10] sm:$0xff] %v218
    %224 = vst [vmem:[%s220 + $0x18] sm:$0xff] %v219
    // Predicated region
    $region18: #{tpu_custom_call.1} parent=1 // pred_check
      _
    $region19: #{tpu_custom_call.1} parent=1 // pred_check_branch
      %226 = sbr.rel (0) target = $region21
    $region20: #{tpu_custom_call.1} parent=1 // pred_region
      %s228 = ssub.s32 1024, 1024
      %229 = vsyncadd [#allocation4], %s228
      %s230 = sshll.u32 [#allocation7], 4
      %s231 = int_to_ptr.vmem [resolvable:$true] %s230
      %236 = dma.vmem_to_hbm [thread:$0]  %s231, 1024, %s2, [#allocation4], 256, 256, 16
    $region21: #{tpu_custom_call.1} parent=1 // pred_fallthru
      _
    // Predicated region
    $region22: #{tpu_custom_call.1} parent=1 // pred_check
      _
    $region23: #{tpu_custom_call.1} parent=1 // pred_check_branch
      %238 = sbr.rel (0) target = $region25
    $region24: #{tpu_custom_call.1} parent=1 // pred_region
      %239 = dma.done [#allocation4], 1024
    $region25: #{tpu_custom_call.1} parent=1 // pred_fallthru
      _
    %240 = vsyncpa [#allocation3], 1
    %241 = vsyncpa [#allocation6], 1
    %242 = vsyncpa [#allocation4], 1

</llo_original>
